<compile_context>
chip_gen: v5e
topology: v5e:2x2
jax: 0.10.0
libtpu: 0.0.40
codegen_flags: <defaults>
</compile_context>

<pallas_src>
import functools
import math

import jax
import jax.numpy as jnp
from jax import lax
from jax.experimental import pallas as pl
from jax.experimental.pallas import tpu as pltpu

BN_EPS = 1e-5
LANE = 128
SUBLANE_BF16 = 16


def _ceil_to(x, m):
    return ((x + m - 1) // m) * m


def _pad2d(x, rows, cols):
    pr, pc = rows - x.shape[0], cols - x.shape[1]
    if pr == 0 and pc == 0:
        return x
    return jnp.pad(x, ((0, pr), (0, pc)))


@functools.lru_cache(maxsize=1)
def _vmem_budget_bytes():
    """Per-TensorCore VMEM budget: physical capacity minus ~15% headroom for
    Mosaic internal scratch / semaphores (~109 MiB v5e/v6e, ~54 MiB v7x)."""
    try:
        cap = int(pltpu.get_tpu_info().vmem_capacity_bytes)
    except Exception:
        cap = 64 * 1024 * 1024            # conservative fallback (fits v7x too)
    return int(cap * 0.85)


def _fit_aggregate_block_rows(n_total, hid_pad, budget):
    """Largest adjacency row stripe whose aggregate-kernel VMEM plan fits the
    per-TC budget.  Plan (bf16 operands, per TensorCore):
       resident support (Buffered(1)) : n_pad * hid_pad * 2
       adj stripe, 2 buffers          : 2 * br * n_pad * 2
       output, 2 buffers              : 2 * br * hid_pad * 2
    """
    cap = _ceil_to(n_total, 8)
    for br in (1024, 512, 256, 128, 64, 32, 16, 8):
        if br > cap:
            continue
        n_pad = _ceil_to(n_total, br)
        need = (n_pad * hid_pad * 2
                + 2 * br * n_pad * 2
                + 2 * br * hid_pad * 2
                + hid_pad * 4)
        if need <= budget:
            return br
    # TODO(synk): for graphs where even an 8-row stripe + resident support
    # overflows VMEM, add a K grid axis over adj columns ("arbitrary", last)
    # with an f32 accumulator scratch instead of shrinking rows further.
    return 8


def _fit_support_rows(n_rows_pad, agg_rows, requested):
    """Largest multiple of agg_rows that divides n_rows_pad and is <= requested
    (support tiles are tiny, so make them big to amortize grid-step overhead)."""
    n_blocks = n_rows_pad // agg_rows
    best = 1
    for d in range(1, n_blocks + 1):
        if n_blocks % d == 0 and agg_rows * d <= requested:
            best = d
    return agg_rows * best


# ----------------------------------------------------------------------------
# Pallas kernels
# ----------------------------------------------------------------------------
def support_kernel(x_ref, ham_ref, out_ref):
    # support = X @ hamilton'   (BN scale already folded into hamilton')
    out_ref[...] = jnp.dot(x_ref[...], ham_ref[...],
                           preferred_element_type=jnp.float32
                           ).astype(out_ref.dtype)


def aggregate_kernel(adj_ref, sup_ref, shift_ref, out_ref):
    # out_stripe = tanh( adj_stripe @ support + shift )  (BN folded; tanh on EUP)
    agg = jnp.dot(adj_ref[...], sup_ref[...],
                  preferred_element_type=jnp.float32)
    out_ref[...] = jnp.tanh(agg + shift_ref[...]).astype(out_ref.dtype)


def distmult_kernel(h_ref, r_ref, scale_ref, shift_ref, ent_ref, out_ref):
    # hr is only (batch, hid): tiny VPU work per entity tile, hidden under the
    # MXU matmul; elementwise BN math kept in f32 (v5e VPU has no bf16 path).
    hr = h_ref[...].astype(jnp.float32) * r_ref[...].astype(jnp.float32)
    hr = hr * scale_ref[...] + shift_ref[...]
    # Entity rows stream untransposed; contract hid on both operands (the
    # per-tile rhs transpose goes to the XLU and hides under the entity DMA).
    scores = lax.dot_general(hr.astype(ent_ref.dtype), ent_ref[...],
                             (((1,), (1,)), ((), ())),
                             preferred_element_type=jnp.float32)
    out_ref[...] = jax.nn.sigmoid(scores)


# ----------------------------------------------------------------------------
# pallas_call wrappers
# ----------------------------------------------------------------------------
def qgnn_support(x, ham, block_rows):
    n, k = x.shape
    hid = ham.shape[1]
    return pl.pallas_call(
        support_kernel,
        out_shape=jax.ShapeDtypeStruct((n, hid), jnp.bfloat16),
        grid=(n // block_rows,),
        in_specs=[
            pl.BlockSpec((block_rows, k), lambda i: (i, 0)),   # streamed X rows
            pl.BlockSpec((k, hid), lambda i: (0, 0),
                         pipeline_mode=pl.Buffered(1)),        # resident weights
        ],
        out_specs=pl.BlockSpec((block_rows, hid), lambda i: (i, 0)),
        compiler_params=pltpu.CompilerParams(
            dimension_semantics=("parallel",),
            vmem_limit_bytes=_vmem_budget_bytes()),
        cost_estimate=pl.CostEstimate(
            flops=int(2 * n * k * hid),
            transcendentals=0,
            bytes_accessed=int(2 * (n * k + k * hid + n * hid))),
    )(x, ham)


def qgnn_aggregate(adj, support, shift, block_rows):
    n, ncol = adj.shape
    hid = support.shape[1]
    return pl.pallas_call(
        aggregate_kernel,
        out_shape=jax.ShapeDtypeStruct((n, hid), jnp.bfloat16),
        grid=(n // block_rows,),
        in_specs=[
            pl.BlockSpec((block_rows, ncol), lambda i: (i, 0)),  # streamed adj
            pl.BlockSpec((ncol, hid), lambda i: (0, 0),
                         pipeline_mode=pl.Buffered(1)),          # resident support
            pl.BlockSpec((1, hid), lambda i: (0, 0),
                         pipeline_mode=pl.Buffered(1)),          # resident BN shift
        ],
        out_specs=pl.BlockSpec((block_rows, hid), lambda i: (i, 0)),
        compiler_params=pltpu.CompilerParams(
            dimension_semantics=("parallel",),
            vmem_limit_bytes=_vmem_budget_bytes()),
        cost_estimate=pl.CostEstimate(
            flops=int(2 * n * ncol * hid),
            transcendentals=int(n * hid),
            bytes_accessed=int(2 * n * ncol + 2 * ncol * hid
                               + 4 * hid + 2 * n * hid)),
    )(adj, support, shift)


def distmult_score(h, r, scale, shift, ent, block_cols):
    b, hid = h.shape
    n_ent = ent.shape[0]
    return pl.pallas_call(
        distmult_kernel,
        out_shape=jax.ShapeDtypeStruct((b, n_ent), jnp.float32),
        grid=(n_ent // block_cols,),
        in_specs=[
            pl.BlockSpec((b, hid), lambda j: (0, 0),
                         pipeline_mode=pl.Buffered(1)),          # resident h
            pl.BlockSpec((b, hid), lambda j: (0, 0),
                         pipeline_mode=pl.Buffered(1)),          # resident r
            pl.BlockSpec((1, hid), lambda j: (0, 0),
                         pipeline_mode=pl.Buffered(1)),          # BN scale
            pl.BlockSpec((1, hid), lambda j: (0, 0),
                         pipeline_mode=pl.Buffered(1)),          # BN shift
            pl.BlockSpec((block_cols, hid), lambda j: (j, 0)),   # streamed entities
        ],
        out_specs=pl.BlockSpec((b, block_cols), lambda j: (0, j)),
        compiler_params=pltpu.CompilerParams(
            dimension_semantics=("parallel",),
            vmem_limit_bytes=_vmem_budget_bytes()),
        cost_estimate=pl.CostEstimate(
            flops=int(2 * b * hid * n_ent),
            transcendentals=int(b * n_ent),
            bytes_accessed=int(4 * b * hid + 8 * hid
                               + 2 * hid * n_ent + 4 * b * n_ent)),
    )(h, r, scale, shift, ent)


# ----------------------------------------------------------------------------
# Glue (quaternion weight expansion, parameter construction, gathers, padding)
# ----------------------------------------------------------------------------
def make_quaternion_mul(kernel):
    """kernel: (in_dim//4, out_dim) -> hamilton: (in_dim, out_dim)."""
    r, i, j, k = jnp.split(kernel, 4, axis=1)
    r2 = jnp.concatenate([r, -i, -j, -k], axis=0)
    i2 = jnp.concatenate([i, r, -k, j], axis=0)
    j2 = jnp.concatenate([j, k, r, -i], axis=0)
    k2 = jnp.concatenate([k, -j, i, r], axis=0)
    return jnp.concatenate([r2, i2, j2, k2], axis=1)


def make_params(key, n_entities, n_relations, emb_dim, hid_dim, num_layers):
    n_total = n_entities + n_relations
    keys = jax.random.split(key, num_layers + 1)
    std = math.sqrt(2.0 / (n_total + emb_dim))          # xavier_normal_
    emb = std * jax.random.normal(keys[0], (n_total, emb_dim), jnp.float32)
    layers = []
    in_dim = emb_dim
    for l in range(num_layers):
        stdv = math.sqrt(6.0 / (in_dim // 4 + hid_dim))
        w = jax.random.uniform(keys[1 + l], (in_dim // 4, hid_dim),
                               jnp.float32, minval=-stdv, maxval=stdv)
        layers.append(dict(
            weight=w,
            gamma=jnp.ones((1, hid_dim), jnp.float32),
            beta=jnp.zeros((1, hid_dim), jnp.float32),
            mean=jnp.zeros((1, hid_dim), jnp.float32),
            var=jnp.ones((1, hid_dim), jnp.float32),
        ))
        in_dim = hid_dim
    bn1 = dict(
        gamma=jnp.ones((1, hid_dim), jnp.float32),
        beta=jnp.zeros((1, hid_dim), jnp.float32),
        mean=jnp.zeros((1, hid_dim), jnp.float32),
        var=jnp.ones((1, hid_dim), jnp.float32),
    )
    return emb, layers, bn1


def make_adj(key, n):
    """Synthetic symmetric normalized adjacency D^-1/2 (A + I) D^-1/2."""
    a = jax.random.bernoulli(key, 0.3, (n, n)).astype(jnp.float32)
    a = jnp.minimum(jnp.maximum(a, a.T) + jnp.eye(n, dtype=jnp.float32), 1.0)
    dinv = 1.0 / jnp.sqrt(a.sum(axis=1))
    return a * dinv[:, None] * dinv[None, :]


def forward_pallas(e1_idx, r_idx, lst_indexes, emb, layers, bn1, adj,
                   n_entities, *, agg_block_rows=None,
                   support_block_rows=4096, block_cols=4096):
    n_total = adj.shape[0]
    batch = e1_idx.shape[0]
    hid_pad = _ceil_to(layers[0]["weight"].shape[1], LANE)
    in_pad = _ceil_to(emb.shape[1], LANE)

    budget = _vmem_budget_bytes()
    if agg_block_rows is None:
        agg_block_rows = _fit_aggregate_block_rows(n_total, hid_pad, budget)
    n_rows_pad = _ceil_to(n_total, agg_block_rows)
    support_rows = _fit_support_rows(n_rows_pad, agg_block_rows,
                                     support_block_rows)

    # one-time pad + bf16 cast of the dense adjacency (the HBM-bound stream)
    adj_p = _pad2d(adj, n_rows_pad, n_rows_pad).astype(jnp.bfloat16)
    # TODO(synk): a further ~2x on the HBM-bound n^2 adj stream is available by
    # storing the 0/1 neighbour matrix as int8 (v5e/v6e) or fp8 (v7x) and
    # applying the D^-1/2 row/column scaling in-kernel in f32.

    # Embedding lookup (glue); pad feature dim to the 128-lane width
    X = jnp.take(emb, lst_indexes, axis=0)
    X = _pad2d(X, n_rows_pad, in_pad).astype(jnp.bfloat16)

    for p in layers:
        ham = make_quaternion_mul(p["weight"])               # (in_dim, hid)
        # Fold eval-mode BatchNorm into the weights: scale into hamilton cols,
        # shift becomes the additive bias in the aggregation kernel.
        scale = p["gamma"] * lax.rsqrt(p["var"] + BN_EPS)    # (1, hid)
        shift = p["beta"] - p["mean"] * scale
        ham_s = _pad2d(ham * scale, in_pad, hid_pad).astype(jnp.bfloat16)
        shift_p = _pad2d(shift, 1, hid_pad)                  # stays f32

        support = qgnn_support(X, ham_s, support_rows)       # (n_pad, hid_pad)
        # NOTE: padded rows of the new X equal tanh(shift) (nonzero).  They
        # stay inert because the padded adjacency *columns* are zero (real
        # rows never see them) and every downstream consumer (e1/r gathers,
        # X[:n_entities]) only touches real rows.
        X = qgnn_aggregate(adj_p, support, shift_p, agg_block_rows)
        in_pad = hid_pad

    # Gathers kept as plain-JAX glue (batch is tiny here).
    # TODO(synk): for large batch, fuse via PrefetchScalarGridSpec-prefetched
    #             e1_idx / r_idx with pl.Element row indexing in distmult.
    # Pad batch to a full bf16 sublane group to avoid masked-store layouts.
    b_pad = _ceil_to(max(batch, SUBLANE_BF16), SUBLANE_BF16)
    h = _pad2d(jnp.take(X, e1_idx, axis=0), b_pad, in_pad)
    r = _pad2d(jnp.take(X, r_idx + n_entities, axis=0), b_pad, in_pad)

    # Entity slab streamed UNTRANSPOSED as (block_cols, hid) tiles -> no extra
    # host-side transpose pass over the entity table; padded entity rows are
    # zero and their sigmoid(0)=0.5 scores are sliced off below.
    n_ent_pad = _ceil_to(n_entities, block_cols)
    ent = _pad2d(X[:n_entities], n_ent_pad, in_pad)

    scale1 = bn1["gamma"] * lax.rsqrt(bn1["var"] + BN_EPS)
    shift1 = bn1["beta"] - bn1["mean"] * scale1
    scale1 = _pad2d(scale1, 1, in_pad)
    shift1 = _pad2d(shift1, 1, in_pad)

    pred = distmult_score(h, r, scale1, shift1, ent, block_cols)
    return pred[:batch, :n_entities]


def forward_reference(e1_idx, r_idx, lst_indexes, emb, layers, bn1, adj,
                      n_entities):
    X = emb[lst_indexes]
    for p in layers:
        ham = make_quaternion_mul(p["weight"])
        agg = adj @ (X @ ham)
        X = jnp.tanh((agg - p["mean"]) / jnp.sqrt(p["var"] + BN_EPS)
                     * p["gamma"] + p["beta"])
    h = X[e1_idx]
    r = X[r_idx + n_entities]
    hr = h * r
    hr = (hr - bn1["mean"]) / jnp.sqrt(bn1["var"] + BN_EPS) * bn1["gamma"] \
        + bn1["beta"]
    return jax.nn.sigmoid(hr @ X[:n_entities].T)


# ----------------------------------------------------------------------------
if __name__ == "__main__":
    n_entities, n_relations = 24, 8
    emb_dim, hid_dim = 32, 32
    num_layers = 2
    batch = 4
    n_total = n_entities + n_relations

    key = jax.random.PRNGKey(0)
    k_par, k_adj, k_e1, k_r = jax.random.split(key, 4)

    emb, layers, bn1 = make_params(k_par, n_entities, n_relations,
                                   emb_dim, hid_dim, num_layers)
    adj = make_adj(k_adj, n_total)

    e1_idx = jax.random.randint(k_e1, (batch,), 0, n_entities)
    r_idx = jax.random.randint(k_r, (batch,), 0, n_relations)
    lst_indexes = jnp.arange(n_total, dtype=jnp.int32)

    # Small tiles so the tiny demo graph still exercises multi-step grids
    # (production defaults: agg rows auto-fit to per-TC VMEM,
    #  support_block_rows=4096, block_cols=4096).
    pred = forward_pallas(e1_idx, r_idx, lst_indexes, emb, layers, bn1, adj,
                          n_entities, agg_block_rows=16,
                          support_block_rows=16, block_cols=128)
    pred = jax.block_until_ready(pred)

    ref = forward_reference(e1_idx, r_idx, lst_indexes, emb, layers, bn1, adj,
                            n_entities)
    assert pred.shape == (batch, n_entities)
    # bf16 matmul operands (f32 accumulation) -> compare at bf16 tolerance
    assert jnp.allclose(pred, ref, atol=2e-2, rtol=2e-2), "mismatch vs reference"

    print("KERNEL_OK")
</pallas_src>

<mosaic_0001>
module attributes {stable_mosaic.version = 11 : i64} {
  func.func @support_kernel(%arg0: i32, %arg1: memref<16x128xbf16, #tpu.memory_space<vmem>>, %arg2: memref<128x128xbf16, #tpu.memory_space<vmem>>, %arg3: memref<16x128xbf16, #tpu.memory_space<vmem>>) attributes {dimension_semantics = [#tpu.dimension_semantics<parallel>], iteration_bounds = array<i64: 2>, scalar_prefetch = 0 : i64, scratch_operands = 0 : i64, tpu.core_type = #tpu.core_type<tc>, window_params = [{transform_indices = @transform_0, window_bounds = array<i64: 16, 128>}, {pipeline_mode = #tpu.pipeline_mode<synchronous>, transform_indices = @transform_1, window_bounds = array<i64: 128, 128>}, {transform_indices = @transform_2, window_bounds = array<i64: 16, 128>}]} {
    %c0 = arith.constant 0 : index
    %c0_0 = arith.constant 0 : index
    %0 = vector.load %arg1[%c0, %c0_0] : memref<16x128xbf16, #tpu.memory_space<vmem>>, vector<16x128xbf16>
    %c0_1 = arith.constant 0 : index
    %c0_2 = arith.constant 0 : index
    %1 = vector.load %arg2[%c0_1, %c0_2] : memref<128x128xbf16, #tpu.memory_space<vmem>>, vector<128x128xbf16>
    %cst = arith.constant dense<0.000000e+00> : vector<16x128xf32>
    %2 = tpu.matmul %0, %1, %cst {dimension_numbers = #tpu.dot_dimension_numbers<[1], [0], [0], [1], [0, 0, 1, 1], [], []>} : vector<16x128xbf16>, vector<128x128xbf16>, vector<16x128xf32> -> vector<16x128xf32>
    %3 = arith.truncf %2 : vector<16x128xf32> to vector<16x128xbf16>
    %c0_3 = arith.constant 0 : index
    %c0_4 = arith.constant 0 : index
    %4 = vector.load %arg3[%c0_3, %c0_4] : memref<16x128xbf16, #tpu.memory_space<vmem>>, vector<16x128xbf16>
    tpu.vector_store %arg3[%c0_3, %c0_4], %3 {strides = array<i32>} : memref<16x128xbf16, #tpu.memory_space<vmem>>, vector<16x128xbf16>,
    return
  }
  func.func @transform_0(%arg0: i32) -> (i32, i32) {
    %c0_i32 = arith.constant 0 : i32
    %c0_i32_0 = arith.constant 0 : i32
    return %arg0, %c0_i32 : i32, i32
  }
  func.func @transform_1(%arg0: i32) -> (i32, i32) {
    %c0_i32 = arith.constant 0 : i32
    %c0_i32_0 = arith.constant 0 : i32
    %c0_i32_1 = arith.constant 0 : i32
    return %c0_i32, %c0_i32_0 : i32, i32
  }
  func.func @transform_2(%arg0: i32) -> (i32, i32) {
    %c0_i32 = arith.constant 0 : i32
    %c0_i32_0 = arith.constant 0 : i32
    return %arg0, %c0_i32 : i32, i32
  }
}

</mosaic_0001>

<llo_original>
// kernel: tpu_custom_call.1
$region0: #{tpu_custom_call.1}
  #allocation0 [shape = 'u32[]', space=smem, size = 0x4, offset = 0x4, fixed_abs, tag = 'smem constant byte address 0x4 - core index']
  #allocation1 [shape = 'u32[72,128]{1,0:T(1,128)}', space=vmem, size = 0x9000, scoped, tag = 'internal scratch']
  %s0 = inlined_call_operand.hbm [shape: bf16[32,128], index: 0, kind: input, shape index: {}]
  %s1 = inlined_call_operand.hbm [shape: bf16[128,128], index: 1, kind: input, shape index: {}]
  %s2 = inlined_call_operand.hbm [shape: bf16[32,128], index: 2, kind: output, shape index: {}]
  %s3 = sld [smem:[#allocation0]]
  $region49: #{tpu_custom_call.1} parent=0
    _
  %s5 = ssub.s32 1, %s3
  %s6 = scalar_select 0, %s5, %s3
  $region1: #{tpu_custom_call.1} parent=0
    #allocation2 [shape = 'u8[8192]{0}', space=vmem, size = 0x2000, scoped, tag = 'input window, operand 0']
    #allocation3 [shape = 's32[2]{0}', space=sflag, size = 0x8, scoped, tag = 'scoped memory for tpu_custom_call.1']
    #allocation4 [shape = 's32[2]{0}', space=sflag, size = 0x8, scoped, tag = 'scoped memory for tpu_custom_call.1']
    #allocation5 [shape = 'u8[32768]{0}', space=vmem, size = 0x8000, scoped, tag = 'input window, operand 1, single buffered']
    #allocation6 [shape = 's32[1]{0}', space=sflag, size = 0x4, scoped, tag = 'scoped memory for tpu_custom_call.1']
    #allocation7 [shape = 'u8[8192]{0}', space=vmem, size = 0x2000, scoped, tag = 'output window, operand 0']
    %7 = vsyncpa [#allocation3], 0
    %s8 = scalar_lea.sflag [#allocation3], 1
    %9 = vsyncpa %s8, 0
    %10 = vsyncpa [#allocation6], 0
    %11 = vsyncpa [#allocation4], 0
    %s12 = scalar_lea.sflag [#allocation4], 1
    %13 = vsyncpa %s12, 0
    loop: start=0, step=1, limit=4
    $region2: #{tpu_custom_call.1} parent=1 // loop_pre_header
      _
    $region3: #{tpu_custom_call.1} parent=1 // loop_header
      %s15 = sphi 0, %s19
      %p16 = scmp.ge.s32.totalorder %s15, 4
      %s25 = sphi 0, %s27
      %s28 = sphi 0, %s25
      %s29 = sphi 0, %s28
      %s45 = sphi 0, %s29
      %s49 = sphi 0, %s49
      %s51 = sphi 0, %s49
      %s52 = sphi 0, %s51
      %s66 = sphi 0, %s52
      %s72 = sphi 0, %s74
      %s75 = sphi 0, %s72
      %s76 = sphi 0, %s75
      %s92 = sphi 0, %s76
    $region4: #{tpu_custom_call.1} parent=1 // loop_header_branch
      %18 = sbr.rel (%p16) target = $region8
    $region5: #{tpu_custom_call.1} parent=1 // loop_body
      %s20 = ssub.s32 %s15, 1
      %s21 = ssub.s32 %s15, 2
      %s22 = sadd.s32 %s15, 1
      %s23 = ssub.s32 %s15, %s22
      %p24 = scmp.eq.s32.totalorder %s23, 0
      %s26 = sadd.s32 %s25, 1
      %s27 = scalar_select %p24, %s25, %s26
      %p30 = pneg %p24
      %p31 = scmp.eq.s32.totalorder %s15, 1
      %p32 = por %p30, %p31
      %p33 = scmp.ne.s32.totalorder %s25, %s28
      %p34 = scmp.eq.s32.totalorder %s15, 0
      %p35 = por %p33, %p34
      %p36 = scmp.ne.s32.totalorder %s25, %s28
      %p37 = scmp.eq.s32.totalorder %s20, 1
      %p38 = por %p36, %p37
      %p39 = scmp.ne.s32.totalorder %s28, %s29
      %p40 = scmp.eq.s32.totalorder %s20, 0
      %p41 = por %p39, %p40
      %p42 = scmp.ne.s32.totalorder %s28, %s29
      %p43 = scmp.eq.s32.totalorder %s21, 1
      %p44 = por %p42, %p43
      %p46 = scmp.ne.s32.totalorder %s29, %s45
      %p47 = scmp.eq.s32.totalorder %s21, 0
      %p48 = por %p46, %p47
      %s50 = sadd.s32 %s49, 1
      %p53 = scmp.eq.s32.totalorder %s15, 1
      %p54 = scmp.ne.s32.totalorder %s49, %s51
      %p55 = scmp.eq.s32.totalorder %s15, 0
      %p56 = por %p54, %p55
      %p57 = scmp.ne.s32.totalorder %s49, %s51
      %p58 = scmp.eq.s32.totalorder %s20, 1
      %p59 = por %p57, %p58
      %p60 = scmp.ne.s32.totalorder %s51, %s52
      %p61 = scmp.eq.s32.totalorder %s20, 0
      %p62 = por %p60, %p61
      %p63 = scmp.ne.s32.totalorder %s51, %s52
      %p64 = scmp.eq.s32.totalorder %s21, 1
      %p65 = por %p63, %p64
      %p67 = scmp.ne.s32.totalorder %s52, %s66
      %p68 = scmp.eq.s32.totalorder %s21, 0
      %p69 = por %p67, %p68
      %s70 = ssub.s32 %s15, %s22
      %p71 = scmp.eq.s32.totalorder %s70, 0
      %s73 = sadd.s32 %s72, 1
      %s74 = scalar_select %p71, %s72, %s73
      %p77 = pneg %p71
      %p78 = scmp.eq.s32.totalorder %s15, 1
      %p79 = por %p77, %p78
      %p80 = scmp.ne.s32.totalorder %s72, %s75
      %p81 = scmp.eq.s32.totalorder %s15, 0
      %p82 = por %p80, %p81
      %p83 = scmp.ne.s32.totalorder %s72, %s75
      %p84 = scmp.eq.s32.totalorder %s20, 1
      %p85 = por %p83, %p84
      %p86 = scmp.ne.s32.totalorder %s75, %s76
      %p87 = scmp.eq.s32.totalorder %s20, 0
      %p88 = por %p86, %p87
      %p89 = scmp.ne.s32.totalorder %s75, %s76
      %p90 = scmp.eq.s32.totalorder %s21, 1
      %p91 = por %p89, %p90
      %p93 = scmp.ne.s32.totalorder %s76, %s92
      %p94 = scmp.eq.s32.totalorder %s21, 0
      %p95 = por %p93, %p94
      %p96 = scmp.le.s32.totalorder 1, %s15
      %p97 = scmp.lt.s32.totalorder %s15, 3
      %p98 = pnand %p96, %p97
      %p99 = pneg %p98
      // Predicated region
      $region9: #{tpu_custom_call.1} parent=5 // pred_check
        _
      $region10: #{tpu_custom_call.1} parent=5 // pred_check_branch
        %101 = sbr.rel (%p98) target = $region12
      $region11: #{tpu_custom_call.1} parent=5 // pred_region
        %s102 = ssub.s32 %s15, 1
        // Predicated region
        $region13: #{tpu_custom_call.1} parent=11 // pred_check
          %p103 = pneg %p62
        $region14: #{tpu_custom_call.1} parent=11 // pred_check_branch
          %105 = sbr.rel (%p103) target = $region16
        $region15: #{tpu_custom_call.1} parent=11 // pred_region
          %107 = vsyncadd [#allocation6], 0
          %s108 = sshll.u32 %s1, 4
          %s109 = int_to_ptr.hbm [resolvable:$true] %s108
          %s110 = sshll.u32 [#allocation5], 4
          %s111 = int_to_ptr.vmem [resolvable:$true] %s110
          %116 = dma.hbm_to_vmem [thread:$0]  %s109, 1024, %s111, [#allocation6], 64, 64, 4
        $region16: #{tpu_custom_call.1} parent=11 // pred_fallthru
          _
      $region12: #{tpu_custom_call.1} parent=5 // pred_fallthru
        _
      %p117 = scmp.lt.s32.totalorder %s15, 2
      // Predicated region
      $region17: #{tpu_custom_call.1} parent=5 // pred_check
        %p118 = pneg %p117
      $region18: #{tpu_custom_call.1} parent=5 // pred_check_branch
        %120 = sbr.rel (%p118) target = $region20
      $region19: #{tpu_custom_call.1} parent=5 // pred_region
        // Predicated region
        $region21: #{tpu_custom_call.1} parent=19 // pred_check
          %p121 = pneg %p35
        $region22: #{tpu_custom_call.1} parent=19 // pred_check_branch
          %123 = sbr.rel (%p121) target = $region24
        $region23: #{tpu_custom_call.1} parent=19 // pred_region
          %s124 = sand.u32 %s25, 1
          %s125 = scalar_lea.sflag [#allocation3], %s124
          %s126 = sand.u32 %s25, 1
          %s127 = smul.addr %s126, 8
          %s128 = scalar_lea.vmem [#allocation2], %s127
          %s129 = smul.u32 2, %s15
          %131 = vsyncadd %s125, 0
          %s132 = smul.addr %s129, 4
          %s133 = scalar_lea.hbm %s0, %s132
          %s134 = sshll.u32 %s133, 4
          %s135 = int_to_ptr.hbm [resolvable:$true] %s134
          %s136 = sshll.u32 %s128, 4
          %s137 = int_to_ptr.vmem [resolvable:$true] %s136
          %142 = dma.hbm_to_vmem [thread:$0]  %s135, 128, %s137, %s125, 64, 64, 4
        $region24: #{tpu_custom_call.1} parent=19 // pred_fallthru
          _
      $region20: #{tpu_custom_call.1} parent=5 // pred_fallthru
        _
      %p143 = scmp.le.s32.totalorder 1, %s15
      %p144 = scmp.lt.s32.totalorder %s15, 3
      %p145 = pnand %p143, %p144
      %p146 = pneg %p145
      // Predicated region
      $region25: #{tpu_custom_call.1} parent=5 // pred_check
        _
      $region26: #{tpu_custom_call.1} parent=5 // pred_check_branch
        %148 = sbr.rel (%p145) target = $region28
      $region27: #{tpu_custom_call.1} parent=5 // pred_region
        %s149 = ssub.s32 %s15, 1
        %s150 = sand.u32 %s28, 1
        %s151 = scalar_lea.sflag [#allocation3], %s150
        %s152 = sand.u32 %s28, 1
        %s153 = smul.addr %s152, 8
        %s154 = scalar_lea.vmem [#allocation2], %s153
        // Predicated region
        $region29: #{tpu_custom_call.1} parent=27 // pred_check
          %p155 = pneg %p41
        $region30: #{tpu_custom_call.1} parent=27 // pred_check_branch
          %157 = sbr.rel (%p155) target = $region32
        $region31: #{tpu_custom_call.1} parent=27 // pred_region
          %159 = dma.done %s151, 128
        $region32: #{tpu_custom_call.1} parent=27 // pred_fallthru
          _
        // Predicated region
        $region33: #{tpu_custom_call.1} parent=27 // pred_check
          %p160 = pneg %p62
        $region34: #{tpu_custom_call.1} parent=27 // pred_check_branch
          %162 = sbr.rel (%p160) target = $region36
        $region35: #{tpu_custom_call.1} parent=27 // pred_region
          %164 = dma.done [#allocation6], 1024
        $region36: #{tpu_custom_call.1} parent=27 // pred_fallthru
          _
        %s165 = sand.u32 %s28, 1
        %s166 = scalar_lea.sflag [#allocation3], %s165
        %s167 = sand.u32 %s28, 1
        %s168 = smul.addr %s167, 8
        %s169 = scalar_lea.vmem [#allocation2], %s168
        %p170 = pneg %p41
        %p171 = pneg %p38
        %p172 = pneg %p62
        %p173 = pneg %p59
        %p174 = pneg %p88
        %p175 = pneg %p85
        %s176 = sand.u32 %s75, 1
        %s177 = scalar_lea.sflag [#allocation4], %s176
        %s178 = sand.u32 %s75, 1
        %s179 = smul.addr %s178, 8
        %s180 = scalar_lea.vmem [#allocation7], %s179
        %s181 = smul.u32 2, %s20
        %s182 = smul.u32 2, %s20
        %v183 = vld [vmem:[%s154] sm:$0xf]
        %v184 = vld [vmem:[%s154 + $0x4] sm:$0xf]
        %v185 = vld [vmem:[#allocation5] sm:$0xf]
        %v186 = vld [vmem:[#allocation5 + $0x4] sm:$0xf]
        %v187 = vld [vmem:[#allocation5 + $0x8] sm:$0xf]
        %v188 = vld [vmem:[#allocation5 + $0xc] sm:$0xf]
        %v189 = vld [vmem:[#allocation5 + $0x10] sm:$0xf]
        %v190 = vld [vmem:[#allocation5 + $0x14] sm:$0xf]
        %v191 = vld [vmem:[#allocation5 + $0x18] sm:$0xf]
        %v192 = vld [vmem:[#allocation5 + $0x1c] sm:$0xf]
        %v193 = vld [vmem:[#allocation5 + $0x20] sm:$0xf]
        %v194 = vld [vmem:[#allocation5 + $0x24] sm:$0xf]
        %v195 = vld [vmem:[#allocation5 + $0x28] sm:$0xf]
        %v196 = vld [vmem:[#allocation5 + $0x2c] sm:$0xf]
        %v197 = vld [vmem:[#allocation5 + $0x30] sm:$0xf]
        %v198 = vld [vmem:[#allocation5 + $0x34] sm:$0xf]
        %v199 = vld [vmem:[#allocation5 + $0x38] sm:$0xf]
        %v200 = vld [vmem:[#allocation5 + $0x3c] sm:$0xf]
        %v203 = vunpack.c.l.b16 %v183
        %v204 = vunpack.c.l.b16 %v184
        %v205 = vpack.c.b16 %v204, %v203
        %v223 = vunpack.c.l.b16 %v185
        %v224 = vunpack.c.l.b16 %v186
        %v225 = vunpack.c.l.b16 %v187
        %v226 = vunpack.c.l.b16 %v188
        %v227 = vunpack.c.l.b16 %v189
        %v228 = vunpack.c.l.b16 %v190
        %v229 = vunpack.c.l.b16 %v191
        %v230 = vunpack.c.l.b16 %v192
        %v231 = vunpack.c.l.b16 %v193
        %v232 = vunpack.c.l.b16 %v194
        %v233 = vunpack.c.l.b16 %v195
        %v234 = vunpack.c.l.b16 %v196
        %v235 = vunpack.c.l.b16 %v197
        %v236 = vunpack.c.l.b16 %v198
        %v237 = vunpack.c.l.b16 %v199
        %v238 = vunpack.c.l.b16 %v200
        %v239 = vpack.c.b16 %v224, %v223
        %v240 = vpack.c.b16 %v226, %v225
        %v241 = vpack.c.b16 %v228, %v227
        %v242 = vpack.c.b16 %v230, %v229
        %v243 = vpack.c.b16 %v232, %v231
        %v244 = vpack.c.b16 %v234, %v233
        %v245 = vpack.c.b16 %v236, %v235
        %v246 = vpack.c.b16 %v238, %v237
        %255 = vmatpush.bf16.msra.mxu0 %v246
        %256 = vmatpush.bf16.msra.mxu0 %v245
        %257 = vmatpush.bf16.msra.mxu0 %v244
        %258 = vmatpush.bf16.msra.mxu0 %v243
        %259 = vmatpush.bf16.msra.mxu0 %v242
        %260 = vmatpush.bf16.msra.mxu0 %v241
        %261 = vmatpush.bf16.msra.mxu0 %v240
        %262 = vmatpush.bf16.msra.mxu0 %v239
        %263 = vmatmul.bf16.gmra.mxu0 %v205
        %v264 = vpop.f32.mrf.mxu0
        %v265 = vadd.f32 0.0, %v264
        %v266 = vpop.f32.mrf.mxu0
        %v267 = vadd.f32 0.0, %v266
        %268 = vdwg.mxu0
        %v269 = vpack.c.bf16 %v265, %v265
        %v270 = vpack.c.bf16 %v267, %v267
        %271 = vst [vmem:[%s180] sm:$0xf] %v269
        %272 = vst [vmem:[%s180 + $0x4] sm:$0xf] %v270
        %s273 = sand.u32 %s75, 1
        %s274 = scalar_lea.sflag [#allocation4], %s273
        %s275 = sand.u32 %s75, 1
        %s276 = smul.addr %s275, 8
        %s277 = scalar_lea.vmem [#allocation7], %s276
        // Predicated region
        $region37: #{tpu_custom_call.1} parent=27 // pred_check
          %p278 = pneg %p85
        $region38: #{tpu_custom_call.1} parent=27 // pred_check_branch
          %280 = sbr.rel (%p278) target = $region40
        $region39: #{tpu_custom_call.1} parent=27 // pred_region
          %s281 = smul.u32 2, %s20
          %283 = vsyncadd %s274, 0
          %s284 = smul.addr %s281, 4
          %s285 = scalar_lea.hbm %s2, %s284
          %s286 = sshll.u32 %s277, 4
          %s287 = int_to_ptr.vmem [resolvable:$true] %s286
          %s288 = sshll.u32 %s285, 4
          %s289 = int_to_ptr.hbm [resolvable:$true] %s288
          %294 = dma.vmem_to_hbm [thread:$0]  %s287, 128, %s289, %s274, 64, 64, 4
        $region40: #{tpu_custom_call.1} parent=27 // pred_fallthru
          _
      $region28: #{tpu_custom_call.1} parent=5 // pred_fallthru
        _
      %p295 = scmp.le.s32.totalorder 2, %s15
      // Predicated region
      $region41: #{tpu_custom_call.1} parent=5 // pred_check
        %p296 = pneg %p295
      $region42: #{tpu_custom_call.1} parent=5 // pred_check_branch
        %298 = sbr.rel (%p296) target = $region44
      $region43: #{tpu_custom_call.1} parent=5 // pred_region
        %s299 = ssub.s32 %s15, 2
        // Predicated region
        $region45: #{tpu_custom_call.1} parent=43 // pred_check
          %p300 = pneg %p91
        $region46: #{tpu_custom_call.1} parent=43 // pred_check_branch
          %302 = sbr.rel (%p300) target = $region48
        $region47: #{tpu_custom_call.1} parent=43 // pred_region
          %s303 = sand.u32 %s76, 1
          %s304 = scalar_lea.sflag [#allocation4], %s303
          %s305 = sand.u32 %s76, 1
          %s306 = smul.addr %s305, 8
          %s307 = scalar_lea.vmem [#allocation7], %s306
          %309 = dma.done %s304, 128
        $region48: #{tpu_custom_call.1} parent=43 // pred_fallthru
          _
      $region44: #{tpu_custom_call.1} parent=5 // pred_fallthru
        _
    $region6: #{tpu_custom_call.1} parent=1 // loop_footer
      %s19 = sadd.s32 1, %s15
    $region7: #{tpu_custom_call.1} parent=1 // loop_footer_branch
      %14 = sbr.rel target = $region3
    $region8: #{tpu_custom_call.1} parent=1 // loop_exit
      _
    %310 = vsyncpa [#allocation3], 1
    %s311 = scalar_lea.sflag [#allocation3], 1
    %312 = vsyncpa %s311, 1
    %313 = vsyncpa [#allocation6], 1
    %314 = vsyncpa [#allocation4], 1
    %s315 = scalar_lea.sflag [#allocation4], 1
    %316 = vsyncpa %s315, 1

</llo_original>
